<compile_context>
chip_gen: v7x
topology: tpu7x:2x2x1
jax: 0.10.0
libtpu: 0.0.40
codegen_flags: <defaults>
</compile_context>

<pallas_src>
import functools
import math

import jax
import jax.numpy as jnp
from jax.experimental import pallas as pl
from jax.experimental.pallas import tpu as pltpu


def _round_up(v, m):
    return ((v + m - 1) // m) * m


def _hw_budgets():
    """(block_budget_bytes, vmem_limit_cap_bytes) for the local TPU generation."""
    cap = 64 << 20  # conservative default (v7x-class)
    try:
        info = pltpu.get_tpu_info()
        cap = int(getattr(info, "vmem_capacity_bytes", cap))
    except Exception:
        pass
    if cap >= (100 << 20):          # v5e / v6e: 128 MiB physical VMEM
        return 80 << 20, 104 << 20
    return 36 << 20, 48 << 20       # v7x: 64 MiB physical VMEM


# --------------------------------------------------------------------------
# Fused single-pass kernel
# --------------------------------------------------------------------------
def _ca_fused_kernel(x_ref, w1_ref, w2_ref, o_ref):
    # x_ref : (TB, CS, L)  input tile (CS/L are the FULL folded dims)
    # w1_ref: (CS, R)      fc1^T, rows repeated S times, pre-scaled by 1/HW
    # w2_ref: (R, CS)      fc2^T, columns repeated S times
    x = x_ref[...]
    # Spatial (lane) reduce with f32 accumulation; Mosaic accumulates the
    # L/128 vregs of each row on the VPU and does one cross-lane reduce.
    row_sum = jnp.sum(x, axis=-1, dtype=jnp.float32)                       # (TB, CS)
    h = jnp.maximum(
        jnp.dot(row_sum, w1_ref[...], preferred_element_type=jnp.float32), 0.0)
    gate = jax.nn.sigmoid(
        jnp.dot(h, w2_ref[...], preferred_element_type=jnp.float32))       # (TB, CS) f32
    # Keep the gate in f32: the multiply promotes per-vreg, cast once at the
    # store. Matches the f32 reference for reduced-precision inputs too.
    o_ref[...] = (x * gate[:, :, None]).astype(o_ref.dtype)


def _channel_attention_fused(x, w_fc1, w_fc2, *, S, CS, L, per_elem,
                             block_budget, vmem_cap):
    B, C, H, W = x.shape
    R = w_fc1.shape[0]
    HW = H * W
    itemsize = jnp.dtype(x.dtype).itemsize

    TB = int(max(1, min(B, block_budget // per_elem)))
    # Prefer >= 4 grid steps (>= 2 per TensorCore on dual-core chips) while
    # each block stays >= ~4 MiB so per-core double-buffering hides the DMAs.
    for steps in (4, 2):
        if B < steps:
            continue
        tb_alt = pl.cdiv(B, steps)
        if tb_alt < TB and tb_alt * per_elem >= (4 << 20):
            TB = tb_alt
            break
    grid_b = pl.cdiv(B, TB)   # partial trailing batch block OK: rows independent

    # Layout plumbing only: contiguous reshape, never a pad/slice HBM round trip.
    x_in = x.reshape(B, CS, L)

    inv_hw = 1.0 / float(HW)
    w1e = jnp.repeat(w_fc1.T.astype(jnp.float32), S, axis=0) * inv_hw      # (CS, R)
    w2e = jnp.repeat(w_fc2.T.astype(jnp.float32), S, axis=1)               # (R, CS)

    # VMEM accounting with real sublane/lane padding of the weight tiles.
    weight_bytes = (2 * 4 * _round_up(CS, 8) * _round_up(R, 128)
                    + 2 * 4 * _round_up(R, 8) * _round_up(CS, 128))
    vmem_limit = int(min(vmem_cap,
                         max(8 << 20, TB * per_elem + weight_bytes + (2 << 20))))

    cost = pl.CostEstimate(
        flops=2 * B * C * HW + 4 * B * C * R,
        transcendentals=B * C,
        bytes_accessed=2 * B * C * HW * itemsize + 4 * (w1e.size + w2e.size))

    out = pl.pallas_call(
        _ca_fused_kernel,
        out_shape=jax.ShapeDtypeStruct((B, CS, L), x.dtype),
        grid_spec=pltpu.PrefetchScalarGridSpec(
            num_scalar_prefetch=0,
            grid=(grid_b,),
            in_specs=[
                pl.BlockSpec((TB, CS, L), lambda b: (b, 0, 0)),
                pl.BlockSpec((CS, R), lambda b: (0, 0)),   # weights stay resident
                pl.BlockSpec((R, CS), lambda b: (0, 0)),
            ],
            out_specs=pl.BlockSpec((TB, CS, L), lambda b: (b, 0, 0)),
        ),
        compiler_params=pltpu.CompilerParams(
            dimension_semantics=("parallel",),
            vmem_limit_bytes=vmem_limit),
        cost_estimate=cost,
        # Note: input_output_aliases={0: 0} would save the output allocation
        # when the caller does not need x afterwards; left off for purity.
    )(x_in, w1e, w2e)

    return out.reshape(B, C, H, W)


# --------------------------------------------------------------------------
# Two-pass fallback (one batch element does not fit VMEM, e.g. v7x / huge C*H*W)
# --------------------------------------------------------------------------
def _ca_sum_kernel(x_ref, sum_ref, *, hw, tl):
    # x_ref: (1, TC, TL); sum_ref: (1, TC, 1) f32 accumulator across the l axis.
    @pl.when(pl.program_id(2) == 0)
    def _():
        sum_ref[...] = jnp.zeros_like(sum_ref)
    x = x_ref[...]
    if hw % tl != 0:
        # Mask the partial trailing spatial chunk (OOB lanes hold garbage).
        lane = jax.lax.broadcasted_iota(jnp.int32, x.shape, 2)
        x = jnp.where(pl.program_id(2) * tl + lane < hw, x, jnp.zeros_like(x))
    sum_ref[...] += jnp.sum(x, axis=-1, keepdims=True, dtype=jnp.float32)


def _ca_scale_kernel(x_ref, gate_ref, o_ref):
    # gate stays f32; multiply promotes, cast once at the store.
    o_ref[...] = (x_ref[...] * gate_ref[...]).astype(o_ref.dtype)


def _channel_attention_two_pass(x, w_fc1, w_fc2, *, block_budget, vmem_cap):
    B, C, H, W = x.shape
    HW = H * W
    itemsize = jnp.dtype(x.dtype).itemsize
    pack = max(8, 32 // itemsize)            # sublane packing: 8 f32 / 16 bf16 / 32 i8

    def cost(tc, tl):
        # pass-2 block footprint: in + out double-buffered + one f32 intermediate
        return _round_up(tc, pack) * _round_up(tl, 128) * (4 * itemsize + 4)

    # Prefer keeping the channel dim whole and chunking the spatial axis.
    if cost(C, min(HW, 128)) <= block_budget:
        tc = C
        if HW <= 128:
            tl = HW
        else:
            tl = (block_budget // cost(C, 128)) * 128
            tl = HW if tl >= HW else tl
    else:
        tl = HW if HW <= 128 else 128
        n = max(1, block_budget // max(1, cost(pack, tl)))
        tc = n * pack
        tc = C if tc >= C else tc            # multiple of 8, or the full C dim
    nc = pl.cdiv(C, tc)
    nl = pl.cdiv(HW, tl)

    x3 = x.reshape(B, C, HW)                 # contiguous reshape, no copy

    blk_in = 2 * _round_up(tc, pack) * _round_up(tl, 128) * itemsize
    vmem1 = int(min(vmem_cap, max(8 << 20, blk_in + (1 << 20))))
    vmem2 = int(min(vmem_cap, max(8 << 20, cost(tc, tl) + (1 << 20))))

    # Pass 1: stream chunks, accumulate per-channel sums (f32).
    sums = pl.pallas_call(
        functools.partial(_ca_sum_kernel, hw=HW, tl=tl),
        out_shape=jax.ShapeDtypeStruct((B, C, 1), jnp.float32),
        grid_spec=pltpu.PrefetchScalarGridSpec(
            num_scalar_prefetch=0,
            grid=(B, nc, nl),
            in_specs=[pl.BlockSpec((1, tc, tl), lambda b, c, l: (b, c, l))],
            out_specs=pl.BlockSpec((1, tc, 1), lambda b, c, l: (b, c, 0)),
        ),
        compiler_params=pltpu.CompilerParams(
            dimension_semantics=("parallel", "parallel", "arbitrary"),
            vmem_limit_bytes=vmem1),
        cost_estimate=pl.CostEstimate(
            flops=B * C * HW, transcendentals=0,
            bytes_accessed=B * C * HW * itemsize + B * C * 4),
    )(x3)

    # Tiny (B, C) gate math: negligible next to the streaming passes.
    mean = sums[:, :, 0] * (1.0 / float(HW))
    h = jnp.maximum(mean @ w_fc1.astype(jnp.float32).T, 0.0)
    gate3 = jax.nn.sigmoid(h @ w_fc2.astype(jnp.float32).T)[:, :, None]    # (B, C, 1)

    # Pass 2: stream chunks again, apply the gate, write out.
    out = pl.pallas_call(
        _ca_scale_kernel,
        out_shape=jax.ShapeDtypeStruct((B, C, HW), x.dtype),
        grid_spec=pltpu.PrefetchScalarGridSpec(
            num_scalar_prefetch=0,
            grid=(B, nc, nl),
            in_specs=[
                pl.BlockSpec((1, tc, tl), lambda b, c, l: (b, c, l)),
                pl.BlockSpec((1, tc, 1), lambda b, c, l: (b, c, 0)),
            ],
            out_specs=pl.BlockSpec((1, tc, tl), lambda b, c, l: (b, c, l)),
        ),
        compiler_params=pltpu.CompilerParams(
            dimension_semantics=("parallel", "parallel", "parallel"),
            vmem_limit_bytes=vmem2),
        cost_estimate=pl.CostEstimate(
            flops=B * C * HW, transcendentals=0,
            bytes_accessed=2 * B * C * HW * itemsize + B * C * 4),
    )(x3, gate3)

    return out.reshape(B, C, H, W)


# --------------------------------------------------------------------------
# Public wrapper
# --------------------------------------------------------------------------
def channel_attention(x, w_fc1, w_fc2, *, block_budget_bytes=None):
    """x: (B, C, H, W); w_fc1: (R, C); w_fc2: (C, R).  Returns (B, C, H, W)."""
    B, C, H, W = x.shape
    HW = H * W
    itemsize = jnp.dtype(x.dtype).itemsize
    pack = max(8, 32 // itemsize)

    block_budget, vmem_cap = _hw_budgets()
    if block_budget_bytes is not None:
        block_budget = int(block_budget_bytes)

    # Sublane fold: only when HW is already lane-aligned and C doesn't fill the
    # dtype's sublane packing; the reshape is contiguous (no HBM round trip).
    S = 1
    if HW % 128 == 0 and C % pack != 0:
        need = pack // math.gcd(C, pack)
        if need > 1 and HW % (need * 128) == 0:
            S = need
    CS, L = C * S, HW // S

    # Honest per-element VMEM footprint: in + out double-buffered (dtype-aware
    # sublane/lane padding) plus one f32 elementwise intermediate.
    CS_pad = _round_up(CS, pack)
    L_pad = _round_up(L, 128)
    per_elem = 4 * CS_pad * L_pad * itemsize + _round_up(CS, 8) * L_pad * 4

    if per_elem <= block_budget:
        return _channel_attention_fused(
            x, w_fc1, w_fc2, S=S, CS=CS, L=L, per_elem=per_elem,
            block_budget=block_budget, vmem_cap=vmem_cap)
    # One batch element alone exceeds the budget -> chunked two-pass streaming.
    return _channel_attention_two_pass(
        x, w_fc1, w_fc2, block_budget=block_budget, vmem_cap=vmem_cap)


def channel_attention_ref(x, w_fc1, w_fc2):
    """Pure-JAX reference mirroring the PyTorch forward."""
    xf = x.astype(jnp.float32)
    avg = jnp.mean(xf, axis=(2, 3))                         # (B, C)
    h = jnp.maximum(avg @ w_fc1.T, 0.0)                     # (B, R)
    a = jax.nn.sigmoid(h @ w_fc2.T)                         # (B, C)
    return (xf * a[:, :, None, None]).astype(x.dtype)


if __name__ == "__main__":
    B, C = 2, 4
    reduction_ratio = 16
    R = max(1, C // reduction_ratio)

    key = jax.random.PRNGKey(0)
    kx, k1, k2, kx2, kx3 = jax.random.split(key, 5)

    w_fc1 = jax.random.normal(k1, (R, C), dtype=jnp.float32) * (1.0 / jnp.sqrt(C))
    w_fc2 = jax.random.normal(k2, (C, R), dtype=jnp.float32) * (1.0 / jnp.sqrt(R))

    # 1) Fused path, lane-aligned spatial dim (H=W=16 -> HW=256, sublane fold).
    x1 = jax.random.normal(kx, (B, C, 16, 16), dtype=jnp.float32)
    out1 = jax.block_until_ready(channel_attention(x1, w_fc1, w_fc2))
    ref1 = channel_attention_ref(x1, w_fc1, w_fc2)
    assert out1.shape == x1.shape
    assert jnp.allclose(out1, ref1, atol=1e-5, rtol=1e-5), "fused (aligned) mismatch"

    # 2) Fused path, non-128-multiple spatial dim (HW=100): no pad/slice round
    #    trips, masked partial lane stores inside the kernel.
    x2 = jax.random.normal(kx2, (B, C, 10, 10), dtype=jnp.float32)
    out2 = jax.block_until_ready(channel_attention(x2, w_fc1, w_fc2))
    ref2 = channel_attention_ref(x2, w_fc1, w_fc2)
    assert jnp.allclose(out2, ref2, atol=1e-5, rtol=1e-5), "fused (unaligned) mismatch"

    # 3) Two-pass fallback (forced via a tiny block budget; exercises the
    #    chunked streaming path used for huge C*H*W on v7x) with a partial
    #    trailing spatial chunk (HW=144).
    x3 = jax.random.normal(kx3, (B, C, 12, 12), dtype=jnp.float32)
    out3 = jax.block_until_ready(
        channel_attention(x3, w_fc1, w_fc2, block_budget_bytes=4096))
    ref3 = channel_attention_ref(x3, w_fc1, w_fc2)
    assert jnp.allclose(out3, ref3, atol=1e-5, rtol=1e-5), "two-pass mismatch"

    print("KERNEL_OK")
</pallas_src>

<mosaic_0001>
module attributes {stable_mosaic.version = 11 : i64} {
  func.func @_ca_fused_kernel(%arg0: i32, %arg1: memref<2x8x128xf32, #tpu.memory_space<vmem>>, %arg2: memref<8x1xf32, #tpu.memory_space<vmem>>, %arg3: memref<1x8xf32, #tpu.memory_space<vmem>>, %arg4: memref<2x8x128xf32, #tpu.memory_space<vmem>>) attributes {dimension_semantics = [#tpu.dimension_semantics<parallel>], iteration_bounds = array<i64: 1>, scalar_prefetch = 0 : i64, scratch_operands = 0 : i64, tpu.core_type = #tpu.core_type<tc>, window_params = [{transform_indices = @transform_0, window_bounds = array<i64: 2, 8, 128>}, {pipeline_mode = #tpu.pipeline_mode<synchronous>, transform_indices = @transform_1, window_bounds = array<i64: 8, 1>}, {pipeline_mode = #tpu.pipeline_mode<synchronous>, transform_indices = @transform_2, window_bounds = array<i64: 1, 8>}, {transform_indices = @transform_3, window_bounds = array<i64: 2, 8, 128>}]} {
    %c0 = arith.constant 0 : index
    %c0_0 = arith.constant 0 : index
    %c0_1 = arith.constant 0 : index
    %0 = vector.load %arg1[%c0, %c0_0, %c0_1] : memref<2x8x128xf32, #tpu.memory_space<vmem>>, vector<2x8x128xf32>
    %cst = arith.constant dense<0.000000e+00> : vector<2x8xf32>
    %1 = vector.multi_reduction <add>, %0, %cst [2] : vector<2x8x128xf32> to vector<2x8xf32>
    %c0_2 = arith.constant 0 : index
    %c0_3 = arith.constant 0 : index
    %2 = vector.load %arg2[%c0_2, %c0_3] : memref<8x1xf32, #tpu.memory_space<vmem>>, vector<8x1xf32>
    %cst_4 = arith.constant dense<0.000000e+00> : vector<2x1xf32>
    %3 = tpu.matmul %1, %2, %cst_4 {dimension_numbers = #tpu.dot_dimension_numbers<[1], [0], [0], [1], [0, 0, 1, 1], [], []>} : vector<2x8xf32>, vector<8x1xf32>, vector<2x1xf32> -> vector<2x1xf32>
    %cst_5 = arith.constant 0.000000e+00 : f32
    %4 = vector.broadcast %cst_5 : f32 to vector<2x1xf32>
    %5 = arith.maximumf %3, %4 : vector<2x1xf32>
    %c0_6 = arith.constant 0 : index
    %c0_7 = arith.constant 0 : index
    %6 = vector.load %arg3[%c0_6, %c0_7] : memref<1x8xf32, #tpu.memory_space<vmem>>, vector<1x8xf32>
    %cst_8 = arith.constant dense<0.000000e+00> : vector<2x8xf32>
    %7 = tpu.matmul %5, %6, %cst_8 {dimension_numbers = #tpu.dot_dimension_numbers<[1], [0], [0], [1], [0, 0, 1, 1], [], []>} : vector<2x1xf32>, vector<1x8xf32>, vector<2x8xf32> -> vector<2x8xf32>
    %8 = arith.negf %7 : vector<2x8xf32>
    %9 = math.exp %8 : vector<2x8xf32>
    %cst_9 = arith.constant 1.000000e+00 : f32
    %10 = vector.broadcast %cst_9 : f32 to vector<2x8xf32>
    %11 = arith.addf %10, %9 : vector<2x8xf32>
    %12 = arith.divf %10, %11 : vector<2x8xf32>
    %13 = vector.shape_cast %12 : vector<2x8xf32> to vector<2x8x1xf32>
    %14 = vector.broadcast %13 : vector<2x8x1xf32> to vector<2x8x128xf32>
    %15 = arith.mulf %0, %14 : vector<2x8x128xf32>
    %c0_10 = arith.constant 0 : index
    %c0_11 = arith.constant 0 : index
    %c0_12 = arith.constant 0 : index
    %16 = vector.load %arg4[%c0_10, %c0_11, %c0_12] : memref<2x8x128xf32, #tpu.memory_space<vmem>>, vector<2x8x128xf32>
    tpu.vector_store %arg4[%c0_10, %c0_11, %c0_12], %15 {strides = array<i32>} : memref<2x8x128xf32, #tpu.memory_space<vmem>>, vector<2x8x128xf32>,
    return
  }
  func.func @transform_0(%arg0: i32) -> (i32, i32, i32) {
    %c0_i32 = arith.constant 0 : i32
    %c0_i32_0 = arith.constant 0 : i32
    %c0_i32_1 = arith.constant 0 : i32
    return %arg0, %c0_i32, %c0_i32_0 : i32, i32, i32
  }
  func.func @transform_1(%arg0: i32) -> (i32, i32) {
    %c0_i32 = arith.constant 0 : i32
    %c0_i32_0 = arith.constant 0 : i32
    %c0_i32_1 = arith.constant 0 : i32
    return %c0_i32, %c0_i32_0 : i32, i32
  }
  func.func @transform_2(%arg0: i32) -> (i32, i32) {
    %c0_i32 = arith.constant 0 : i32
    %c0_i32_0 = arith.constant 0 : i32
    %c0_i32_1 = arith.constant 0 : i32
    return %c0_i32, %c0_i32_0 : i32, i32
  }
  func.func @transform_3(%arg0: i32) -> (i32, i32, i32) {
    %c0_i32 = arith.constant 0 : i32
    %c0_i32_0 = arith.constant 0 : i32
    %c0_i32_1 = arith.constant 0 : i32
    return %arg0, %c0_i32, %c0_i32_0 : i32, i32, i32
  }
}

</mosaic_0001>

<llo_original>
// kernel: tpu_custom_call.1
$region0: #{tpu_custom_call.1}
  #allocation0 [shape = 'u32[]', space=smem, size = 0x4, offset = 0x4, fixed_abs, tag = 'smem constant byte address 0x4 - core index']
  #allocation1 [shape = 'u32[144,128]{1,0:T(1,128)}', space=vmem, size = 0x12000, scoped, tag = 'internal scratch']
  %s0 = inlined_call_operand.hbm [shape: f32[2,8,128], index: 0, kind: input, shape index: {}]
  %s1 = inlined_call_operand.vmem [shape: f32[8,1], index: 1, kind: input, shape index: {}]
  %s2 = inlined_call_operand.vmem [shape: f32[1,8], index: 2, kind: input, shape index: {}]
  %s3 = inlined_call_operand.hbm [shape: f32[2,8,128], index: 3, kind: output, shape index: {}]
  %s4 = sld [smem:[#allocation0]]
  $region26: #{tpu_custom_call.1} parent=0
    _
  %s6 = ssub.s32 1, %s4
  %s7 = scalar_select 0, %s6, %s4
  $region1: #{tpu_custom_call.1} parent=0
    #allocation2 [shape = 'u8[8192]{0}', space=vmem, size = 0x2000, scoped, tag = 'input window, operand 0, single buffered']
    #allocation3 [shape = 's32[1]{0}', space=sflag, size = 0x4, scoped, tag = 'scoped memory for tpu_custom_call.1']
    #allocation4 [shape = 's32[1]{0}', space=sflag, size = 0x4, scoped, tag = 'scoped memory for tpu_custom_call.1']
    #allocation5 [shape = 'u8[8192]{0}', space=vmem, size = 0x2000, scoped, tag = 'output window, operand 0, single buffered']
    %8 = vsyncpa [#allocation3], 0
    %9 = vsyncpa [#allocation4], 0
    // Predicated region
    $region2: #{tpu_custom_call.1} parent=1 // pred_check
      _
    $region3: #{tpu_custom_call.1} parent=1 // pred_check_branch
      %11 = sbr.rel (0) target = $region5
    $region4: #{tpu_custom_call.1} parent=1 // pred_region
      %s13 = ssub.s32 256, 256
      %14 = vsyncadd [#allocation3], %s13
      %s15 = sshll.u32 [#allocation2], 4
      %s16 = int_to_ptr.vmem [resolvable:$true] %s15
      %21 = dma.hbm_to_vmem [thread:$0]  %s0, 256, %s16, [#allocation3], 128, 128, 8
    $region5: #{tpu_custom_call.1} parent=1 // pred_fallthru
      _
    // Predicated region
    $region6: #{tpu_custom_call.1} parent=1 // pred_check
      _
    $region7: #{tpu_custom_call.1} parent=1 // pred_check_branch
      %23 = sbr.rel (0) target = $region9
    $region8: #{tpu_custom_call.1} parent=1 // pred_region
      _
    $region9: #{tpu_custom_call.1} parent=1 // pred_fallthru
      _
    // Predicated region
    $region10: #{tpu_custom_call.1} parent=1 // pred_check
      _
    $region11: #{tpu_custom_call.1} parent=1 // pred_check_branch
      %25 = sbr.rel (0) target = $region13
    $region12: #{tpu_custom_call.1} parent=1 // pred_region
      _
    $region13: #{tpu_custom_call.1} parent=1 // pred_fallthru
      _
    // Predicated region
    $region14: #{tpu_custom_call.1} parent=1 // pred_check
      _
    $region15: #{tpu_custom_call.1} parent=1 // pred_check_branch
      %27 = sbr.rel (0) target = $region17
    $region16: #{tpu_custom_call.1} parent=1 // pred_region
      %28 = dma.done [#allocation3], 256
    $region17: #{tpu_custom_call.1} parent=1 // pred_fallthru
      _
    %v29 = vld [vmem:[#allocation2] sm:$0xff]
    %v30 = vld [vmem:[#allocation2 + $0x8] sm:$0xff]
    %31 = vadd.xlane.f32.xlu0 %v29
    %v32 = vpop.xlane.xlu0 %31
    %33 = vadd.xlane.f32.xlu0 %v30
    %v34 = vpop.xlane.xlu0 %33
    %v35 = vld [vmem:[%s1] sm:$0xff]
    %v38 = vlaneseq
    %v39 = vand.u32 %v38, 127
    %v40 = vlaneseq
    %v41 = vshrl.u32 %v40, 7
    %v42 = vsub.s32 %v39, %v41
    %v43 = vrot.slane %v32, %v42
    %v44 = vlaneseq
    %v45 = vshrl.u32 %v44, 7
    %v46 = vsub.s32 %v39, %v45
    %v47 = vrot.slane %v34, %v46
    %vm48 = vcmask 1041409
    %v49 = vsel %vm48, %v47, %v43
    %vm50 = vcmask 64512
    %v51 = vsel %vm50, %v49, 0
    %53 = vmatprep.subr.mxu0 0.0
    %54 = vmatpush1.msra.mxu0 %v35
    %55 = vmatprep.subr.mxu0 0.0
    %56 = vmatpush1.msra.mxu0 0.0
    %57 = vmatprep.subr.mxu0 0.0
    %58 = vmatpush1.msra.mxu0 0.0
    %59 = vmatprep.subr.mxu0 0.0
    %60 = vmatpush1.msra.mxu0 0.0
    %61 = vmatprep.subr.mxu0 0.0
    %62 = vmatpush1.msra.mxu0 0.0
    %63 = vmatprep.subr.mxu0 0.0
    %64 = vmatpush1.msra.mxu0 0.0
    %65 = vmatprep.subr.mxu0 0.0
    %66 = vmatpush1.msra.mxu0 0.0
    %67 = vmatprep.subr.mxu0 0.0
    %68 = vmatpush1.msra.mxu0 0.0
    %69 = vmatprep.subr.mxu0 0.0
    %70 = vmatpush1.msra.mxu0 0.0
    %71 = vmatprep.subr.mxu0 0.0
    %72 = vmatpush1.msra.mxu0 0.0
    %73 = vmatprep.subr.mxu0 0.0
    %74 = vmatpush1.msra.mxu0 0.0
    %75 = vmatprep.subr.mxu0 0.0
    %76 = vmatpush1.msra.mxu0 0.0
    %77 = vmatprep.subr.mxu0 0.0
    %78 = vmatpush1.msra.mxu0 0.0
    %79 = vmatprep.subr.mxu0 0.0
    %80 = vmatpush1.msra.mxu0 0.0
    %81 = vmatprep.subr.mxu0 0.0
    %82 = vmatpush1.msra.mxu0 0.0
    %83 = vmatprep.subr.mxu0 0.0
    %84 = vmatpush1.msra.mxu0 0.0
    %85 = vmatprep.subr.mxu0 0.0
    %86 = vmatpush1.msra.mxu0 0.0
    %87 = vmatprep.subr.mxu0 0.0
    %88 = vmatpush1.msra.mxu0 0.0
    %89 = vmatprep.subr.mxu0 0.0
    %90 = vmatpush1.msra.mxu0 0.0
    %91 = vmatprep.subr.mxu0 0.0
    %92 = vmatpush1.msra.mxu0 0.0
    %93 = vmatprep.subr.mxu0 0.0
    %94 = vmatpush1.msra.mxu0 0.0
    %95 = vmatprep.subr.mxu0 0.0
    %96 = vmatpush1.msra.mxu0 0.0
    %97 = vmatprep.subr.mxu0 0.0
    %98 = vmatpush1.msra.mxu0 0.0
    %99 = vmatprep.subr.mxu0 0.0
    %100 = vmatpush1.msra.mxu0 0.0
    %101 = vmatprep.subr.mxu0 0.0
    %102 = vmatpush1.msra.mxu0 0.0
    %103 = vmatprep.subr.mxu0 0.0
    %104 = vmatpush1.msra.mxu0 0.0
    %105 = vmatprep.subr.mxu0 0.0
    %106 = vmatpush1.msra.mxu0 0.0
    %107 = vmatprep.subr.mxu0 0.0
    %108 = vmatpush1.msra.mxu0 0.0
    %109 = vmatprep.subr.mxu0 0.0
    %110 = vmatpush1.msra.mxu0 0.0
    %111 = vmatprep.subr.mxu0 0.0
    %112 = vmatpush1.msra.mxu0 0.0
    %113 = vmatprep.subr.mxu0 0.0
    %114 = vmatpush1.msra.mxu0 0.0
    %115 = vmatprep.subr.mxu0 0.0
    %116 = vmatpush1.msra.mxu0 0.0
    %117 = vmatprep.mubr.f32.mxu0 0.0
    %118 = vmatmul.mubr.f32.gmra.mrb[0].mxu0 %v51
    %v119 = vpop.f32.mrb[0].mxu0
    %v120 = vadd.f32 0.0, %v119
    %v121 = vpop.f32.mrb[0].mxu0
    %122 = vdwg.mxu0
    %v123 = vmax.f32 %v120, 0.0
    %v124 = vld [vmem:[%s2] sm:$0x1]
    %vm125 = vcmask 7168
    %v127 = vsel %vm125, %v123, 0
    %vm129 = vcmask 1040384
    %v131 = vsel %vm129, %v124, 0
    %133 = vmatprep.subr.mxu0 0.0
    %134 = vmatpush1.msra.mxu0 %v131
    %135 = vmatprep.subr.mxu0 0.0
    %136 = vmatpush1.msra.mxu0 0.0
    %137 = vmatprep.subr.mxu0 0.0
    %138 = vmatpush1.msra.mxu0 0.0
    %139 = vmatprep.subr.mxu0 0.0
    %140 = vmatpush1.msra.mxu0 0.0
    %141 = vmatprep.subr.mxu0 0.0
    %142 = vmatpush1.msra.mxu0 0.0
    %143 = vmatprep.subr.mxu0 0.0
    %144 = vmatpush1.msra.mxu0 0.0
    %145 = vmatprep.subr.mxu0 0.0
    %146 = vmatpush1.msra.mxu0 0.0
    %147 = vmatprep.subr.mxu0 0.0
    %148 = vmatpush1.msra.mxu0 0.0
    %149 = vmatprep.subr.mxu0 0.0
    %150 = vmatpush1.msra.mxu0 0.0
    %151 = vmatprep.subr.mxu0 0.0
    %152 = vmatpush1.msra.mxu0 0.0
    %153 = vmatprep.subr.mxu0 0.0
    %154 = vmatpush1.msra.mxu0 0.0
    %155 = vmatprep.subr.mxu0 0.0
    %156 = vmatpush1.msra.mxu0 0.0
    %157 = vmatprep.subr.mxu0 0.0
    %158 = vmatpush1.msra.mxu0 0.0
    %159 = vmatprep.subr.mxu0 0.0
    %160 = vmatpush1.msra.mxu0 0.0
    %161 = vmatprep.subr.mxu0 0.0
    %162 = vmatpush1.msra.mxu0 0.0
    %163 = vmatprep.subr.mxu0 0.0
    %164 = vmatpush1.msra.mxu0 0.0
    %165 = vmatprep.subr.mxu0 0.0
    %166 = vmatpush1.msra.mxu0 0.0
    %167 = vmatprep.subr.mxu0 0.0
    %168 = vmatpush1.msra.mxu0 0.0
    %169 = vmatprep.subr.mxu0 0.0
    %170 = vmatpush1.msra.mxu0 0.0
    %171 = vmatprep.subr.mxu0 0.0
    %172 = vmatpush1.msra.mxu0 0.0
    %173 = vmatprep.subr.mxu0 0.0
    %174 = vmatpush1.msra.mxu0 0.0
    %175 = vmatprep.subr.mxu0 0.0
    %176 = vmatpush1.msra.mxu0 0.0
    %177 = vmatprep.subr.mxu0 0.0
    %178 = vmatpush1.msra.mxu0 0.0
    %179 = vmatprep.subr.mxu0 0.0
    %180 = vmatpush1.msra.mxu0 0.0
    %181 = vmatprep.subr.mxu0 0.0
    %182 = vmatpush1.msra.mxu0 0.0
    %183 = vmatprep.subr.mxu0 0.0
    %184 = vmatpush1.msra.mxu0 0.0
    %185 = vmatprep.subr.mxu0 0.0
    %186 = vmatpush1.msra.mxu0 0.0
    %187 = vmatprep.subr.mxu0 0.0
    %188 = vmatpush1.msra.mxu0 0.0
    %189 = vmatprep.subr.mxu0 0.0
    %190 = vmatpush1.msra.mxu0 0.0
    %191 = vmatprep.subr.mxu0 0.0
    %192 = vmatpush1.msra.mxu0 0.0
    %193 = vmatprep.subr.mxu0 0.0
    %194 = vmatpush1.msra.mxu0 0.0
    %195 = vmatprep.subr.mxu0 0.0
    %196 = vmatpush1.msra.mxu0 0.0
    %197 = vmatprep.mubr.f32.mxu0 0.0
    %198 = vmatmul.mubr.f32.gmra.mrb[0].mxu0 %v127
    %v199 = vpop.f32.mrb[0].mxu0
    %v200 = vadd.f32 0.0, %v199
    %v201 = vpop.f32.mrb[0].mxu0
    %202 = vdwg.mxu0
    %v203 = vxor.u32 %v200, 2147483648
    %v204 = vmul.f32 %v203, 1.442695
    %v205 = vpow.pop %v204
    %v206 = vadd.f32 %v205, 1.0
    %v207 = vrcp.pop %v206
    %v208 = vmul.f32 1.0, %v207
    %v209 = vlaneseq
    %v210 = vshrl.u32 %v209, 7
    %v211 = vsub.s32 0, %v210
    %v212 = vrot.slane %v208, %v211
    %214 = vbcast.lane.b32.xlu0 %v212, 256
    %v215 = vpop.permute.xlu0 %214
    %v216 = vlaneseq
    %v217 = vshrl.u32 %v216, 7
    %v218 = vsub.s32 1, %v217
    %v219 = vrot.slane %v208, %v218
    %221 = vbcast.lane.b32.xlu0 %v219, 256
    %v222 = vpop.permute.xlu0 %221
    %v223 = vmul.f32 %v29, %v215
    %v224 = vmul.f32 %v30, %v222
    %225 = vst [vmem:[#allocation5] sm:$0xff] %v223
    %226 = vst [vmem:[#allocation5 + $0x8] sm:$0xff] %v224
    // Predicated region
    $region18: #{tpu_custom_call.1} parent=1 // pred_check
      _
    $region19: #{tpu_custom_call.1} parent=1 // pred_check_branch
      %228 = sbr.rel (0) target = $region21
    $region20: #{tpu_custom_call.1} parent=1 // pred_region
      %s230 = ssub.s32 256, 256
      %231 = vsyncadd [#allocation4], %s230
      %s232 = sshll.u32 [#allocation5], 4
      %s233 = int_to_ptr.vmem [resolvable:$true] %s232
      %238 = dma.vmem_to_hbm [thread:$0]  %s233, 256, %s3, [#allocation4], 128, 128, 8
    $region21: #{tpu_custom_call.1} parent=1 // pred_fallthru
      _
    // Predicated region
    $region22: #{tpu_custom_call.1} parent=1 // pred_check
      _
    $region23: #{tpu_custom_call.1} parent=1 // pred_check_branch
      %240 = sbr.rel (0) target = $region25
    $region24: #{tpu_custom_call.1} parent=1 // pred_region
      %241 = dma.done [#allocation4], 256
    $region25: #{tpu_custom_call.1} parent=1 // pred_fallthru
      _
    %242 = vsyncpa [#allocation3], 1
    %243 = vsyncpa [#allocation4], 1

</llo_original>
